<compile_context>
chip_gen: v5e
topology: v5e:2x2
jax: 0.10.0
libtpu: 0.0.40
codegen_flags: <defaults>
</compile_context>

<pallas_src>
import jax
import jax.numpy as jnp
from jax.experimental import pallas as pl
from jax.experimental.pallas import tpu as pltpu

H = 128        # hidden width
N_IN = 4       # CartPole observation dim
N_OUT = 2      # action dim
N_PAD = 128    # padded output lanes (lane-dense stores)


def qnet_kernel(x_ref, w1_ref, b1_ref, w2_ref, b2_ref, w3_ref, b3_ref, o_ref):
    # x_ref: (TB, 4) f32 tile; weights/biases are full arrays resident in VMEM.
    x = x_ref[...]                                                   # (TB, 4)

    # fc1 + ReLU — K=4 contraction done on the VPU as 4 broadcast FMAs
    # (a (TB,4)@(4,128) matmul would use <4% of the MXU contraction depth and
    #  still pay full MXU push/pop latency; this overlaps with the fc2 MXU work).
    h1 = b1_ref[...] + x[:, 0:1] * w1_ref[0:1, :]                    # (TB, 128)
    for k in range(1, N_IN):                                         # unrolled
        h1 = h1 + x[:, k:k + 1] * w1_ref[k:k + 1, :]
    h1 = jnp.maximum(h1, 0.0)

    # fc2 + ReLU (MXU, f32 accumulation)
    h2 = jnp.dot(h1, w2_ref[...], preferred_element_type=jnp.float32)
    h2 = jnp.maximum(h2 + b2_ref[...], 0.0)                          # (TB, 128)

    # fc3 — weights zero-padded to 128 output lanes so the store is lane-dense.
    out = jnp.dot(h2, w3_ref[...], preferred_element_type=jnp.float32)
    o_ref[...] = (out + b3_ref[...]).astype(o_ref.dtype)             # (TB, 128)


def _round_up(n, m):
    return ((n + m - 1) // m) * m


def _default_batch_tile():
    """Per-generation batch tile. Live set per tile ≈ TB*(4+3*128)*4 B ≈ 1.5 KiB/row,
    so these fit comfortably in the scoped VMEM default on every generation."""
    try:
        kind = jax.devices()[0].device_kind.lower()
    except Exception:
        kind = ""
    if "v6" in kind:
        return 2048    # v6e: 128 MiB VMEM — bigger tiles amortize ~0.35 µs/step
    return 1024        # safe for v5e (16 MiB scoped default) and v7x (64 MiB / 2 TCs)


def qnet_forward(x, params):
    """x: (B, 4) float32. params: dict of weights/biases (features-last layout)."""
    w1, b1 = params["w1"], params["b1"]
    w2, b2 = params["w2"], params["b2"]
    w3, b3 = params["w3"], params["b3"]

    B = x.shape[0]
    TB = min(_default_batch_tile(), _round_up(B, 8))   # multiple of 8 sublanes
    B_pad = _round_up(B, TB)
    if B_pad != B:
        x = jnp.pad(x, ((0, B_pad - B), (0, 0)))       # tail tile handled by padding

    # Lane-dense output: pad the 2-wide head to 128 lanes with zeros.
    w3p = jnp.pad(w3, ((0, 0), (0, N_PAD - w3.shape[1])))
    b3p = jnp.pad(b3, ((0, 0), (0, N_PAD - b3.shape[1])))

    grid = (B_pad // TB,)
    flops = 2 * B_pad * (N_IN * H + H * H + H * N_PAD)
    bytes_accessed = (x.size + B_pad * N_PAD) * 4 + \
                     (w1.size + b1.size + w2.size + b2.size + w3p.size + b3p.size) * 4

    out = pl.pallas_call(
        qnet_kernel,
        out_shape=jax.ShapeDtypeStruct((B_pad, N_PAD), jnp.float32),
        grid_spec=pltpu.PrefetchScalarGridSpec(
            num_scalar_prefetch=0,
            grid=grid,
            in_specs=[
                pl.BlockSpec((TB, N_IN), lambda i: (i, 0)),    # x: streamed per tile
                pl.BlockSpec((N_IN, H), lambda i: (0, 0)),     # w1: resident
                pl.BlockSpec((1, H), lambda i: (0, 0)),        # b1
                pl.BlockSpec((H, H), lambda i: (0, 0)),        # w2
                pl.BlockSpec((1, H), lambda i: (0, 0)),        # b2
                pl.BlockSpec((H, N_PAD), lambda i: (0, 0)),    # w3 (padded)
                pl.BlockSpec((1, N_PAD), lambda i: (0, 0)),    # b3 (padded)
            ],
            out_specs=pl.BlockSpec((TB, N_PAD), lambda i: (i, 0)),
        ),
        compiler_params=pltpu.CompilerParams(
            dimension_semantics=("parallel",),                 # shard over 2 TCs on v7x
        ),
        cost_estimate=pl.CostEstimate(
            flops=flops, transcendentals=0, bytes_accessed=bytes_accessed),
    )(x, w1, b1, w2, b2, w3p, b3p)

    return out[:B, :N_OUT]


def init_qnet_params(key):
    """Deterministic init mirroring nn.Linear shapes (stored transposed:
    weights are (in_features, out_features) so the kernel does x @ W)."""
    def linear_init(k, fan_in, fan_out):
        kw, kb = jax.random.split(k)
        bound = 1.0 / jnp.sqrt(jnp.float32(fan_in))
        w = jax.random.uniform(kw, (fan_in, fan_out), jnp.float32, -bound, bound)
        b = jax.random.uniform(kb, (1, fan_out), jnp.float32, -bound, bound)
        return w, b

    k1, k2, k3 = jax.random.split(key, 3)
    w1, b1 = linear_init(k1, N_IN, H)
    w2, b2 = linear_init(k2, H, H)
    w3, b3 = linear_init(k3, H, N_OUT)
    return {"w1": w1, "b1": b1, "w2": w2, "b2": b2, "w3": w3, "b3": b3}


def qnet_reference(x, p):
    """Pure-JAX reference (exact f32 matmuls) for correctness checking."""
    hi = jax.lax.Precision.HIGHEST
    h1 = jnp.maximum(jnp.dot(x, p["w1"], precision=hi) + p["b1"], 0.0)
    h2 = jnp.maximum(jnp.dot(h1, p["w2"], precision=hi) + p["b2"], 0.0)
    return jnp.dot(h2, p["w3"], precision=hi) + p["b3"]


# TODO(synk): sample_action's epsilon-greedy branch uses host-side Python RNG;
# only the network forward pass is implemented here (argmax can be fused later).

if __name__ == "__main__":
    key = jax.random.PRNGKey(0)
    kp, kx1, kx2 = jax.random.split(key, 3)

    params = init_qnet_params(kp)

    # Small batch of CartPole-style observations: (B, 4)
    x_small = jax.random.normal(kx1, (8, 4), dtype=jnp.float32)
    out_small = jax.block_until_ready(qnet_forward(x_small, params))
    ref_small = qnet_reference(x_small, params)
    assert out_small.shape == (8, 2), out_small.shape
    assert jnp.allclose(out_small, ref_small, atol=1e-4, rtol=1e-4), \
        "mismatch vs reference (B=8)"

    # Non-multiple-of-8 batch to exercise the padding / tail-tile path.
    x_odd = jax.random.normal(kx2, (100, 4), dtype=jnp.float32)
    out_odd = jax.block_until_ready(qnet_forward(x_odd, params))
    ref_odd = qnet_reference(x_odd, params)
    assert out_odd.shape == (100, 2), out_odd.shape
    assert jnp.allclose(out_odd, ref_odd, atol=1e-4, rtol=1e-4), \
        "mismatch vs reference (B=100)"

    print("KERNEL_OK")
</pallas_src>

<mosaic_0001>
module attributes {stable_mosaic.version = 11 : i64} {
  func.func @qnet_kernel(%arg0: i32, %arg1: memref<8x4xf32, #tpu.memory_space<vmem>>, %arg2: memref<4x128xf32, #tpu.memory_space<vmem>>, %arg3: memref<1x128xf32, #tpu.memory_space<vmem>>, %arg4: memref<128x128xf32, #tpu.memory_space<vmem>>, %arg5: memref<1x128xf32, #tpu.memory_space<vmem>>, %arg6: memref<128x128xf32, #tpu.memory_space<vmem>>, %arg7: memref<1x128xf32, #tpu.memory_space<vmem>>, %arg8: memref<8x128xf32, #tpu.memory_space<vmem>>) attributes {dimension_semantics = [#tpu.dimension_semantics<parallel>], iteration_bounds = array<i64: 1>, scalar_prefetch = 0 : i64, scratch_operands = 0 : i64, tpu.core_type = #tpu.core_type<tc>, window_params = [{transform_indices = @transform_0, window_bounds = array<i64: 8, 4>}, {pipeline_mode = #tpu.pipeline_mode<synchronous>, transform_indices = @transform_1, window_bounds = array<i64: 4, 128>}, {pipeline_mode = #tpu.pipeline_mode<synchronous>, transform_indices = @transform_2, window_bounds = array<i64: 1, 128>}, {pipeline_mode = #tpu.pipeline_mode<synchronous>, transform_indices = @transform_3, window_bounds = array<i64: 128, 128>}, {pipeline_mode = #tpu.pipeline_mode<synchronous>, transform_indices = @transform_4, window_bounds = array<i64: 1, 128>}, {pipeline_mode = #tpu.pipeline_mode<synchronous>, transform_indices = @transform_5, window_bounds = array<i64: 128, 128>}, {pipeline_mode = #tpu.pipeline_mode<synchronous>, transform_indices = @transform_6, window_bounds = array<i64: 1, 128>}, {transform_indices = @transform_7, window_bounds = array<i64: 8, 128>}]} {
    %c0 = arith.constant 0 : index
    %c0_0 = arith.constant 0 : index
    %0 = vector.load %arg1[%c0, %c0_0] : memref<8x4xf32, #tpu.memory_space<vmem>>, vector<8x4xf32>
    %c0_1 = arith.constant 0 : index
    %c0_2 = arith.constant 0 : index
    %1 = vector.load %arg3[%c0_1, %c0_2] : memref<1x128xf32, #tpu.memory_space<vmem>>, vector<1x128xf32>
    %2 = vector.extract_strided_slice %0 {offsets = [0, 0], sizes = [8, 1], strides = [1, 1]} : vector<8x4xf32> to vector<8x1xf32>
    %c0_3 = arith.constant 0 : index
    %c0_4 = arith.constant 0 : index
    %3 = vector.load %arg2[%c0_3, %c0_4] : memref<4x128xf32, #tpu.memory_space<vmem>>, vector<1x128xf32>
    %4 = vector.broadcast %2 : vector<8x1xf32> to vector<8x128xf32>
    %5 = vector.broadcast %3 : vector<1x128xf32> to vector<8x128xf32>
    %6 = arith.mulf %4, %5 : vector<8x128xf32>
    %7 = vector.broadcast %1 : vector<1x128xf32> to vector<8x128xf32>
    %8 = arith.addf %7, %6 : vector<8x128xf32>
    %9 = vector.extract_strided_slice %0 {offsets = [0, 1], sizes = [8, 1], strides = [1, 1]} : vector<8x4xf32> to vector<8x1xf32>
    %c1 = arith.constant 1 : index
    %c0_5 = arith.constant 0 : index
    %10 = vector.load %arg2[%c1, %c0_5] : memref<4x128xf32, #tpu.memory_space<vmem>>, vector<1x128xf32>
    %11 = vector.broadcast %9 : vector<8x1xf32> to vector<8x128xf32>
    %12 = vector.broadcast %10 : vector<1x128xf32> to vector<8x128xf32>
    %13 = arith.mulf %11, %12 : vector<8x128xf32>
    %14 = arith.addf %8, %13 : vector<8x128xf32>
    %15 = vector.extract_strided_slice %0 {offsets = [0, 2], sizes = [8, 1], strides = [1, 1]} : vector<8x4xf32> to vector<8x1xf32>
    %c2 = arith.constant 2 : index
    %c0_6 = arith.constant 0 : index
    %16 = vector.load %arg2[%c2, %c0_6] : memref<4x128xf32, #tpu.memory_space<vmem>>, vector<1x128xf32>
    %17 = vector.broadcast %15 : vector<8x1xf32> to vector<8x128xf32>
    %18 = vector.broadcast %16 : vector<1x128xf32> to vector<8x128xf32>
    %19 = arith.mulf %17, %18 : vector<8x128xf32>
    %20 = arith.addf %14, %19 : vector<8x128xf32>
    %21 = vector.extract_strided_slice %0 {offsets = [0, 3], sizes = [8, 1], strides = [1, 1]} : vector<8x4xf32> to vector<8x1xf32>
    %c3 = arith.constant 3 : index
    %c0_7 = arith.constant 0 : index
    %22 = vector.load %arg2[%c3, %c0_7] : memref<4x128xf32, #tpu.memory_space<vmem>>, vector<1x128xf32>
    %23 = vector.broadcast %21 : vector<8x1xf32> to vector<8x128xf32>
    %24 = vector.broadcast %22 : vector<1x128xf32> to vector<8x128xf32>
    %25 = arith.mulf %23, %24 : vector<8x128xf32>
    %26 = arith.addf %20, %25 : vector<8x128xf32>
    %cst = arith.constant 0.000000e+00 : f32
    %27 = vector.broadcast %cst : f32 to vector<8x128xf32>
    %28 = arith.maximumf %26, %27 : vector<8x128xf32>
    %c0_8 = arith.constant 0 : index
    %c0_9 = arith.constant 0 : index
    %29 = vector.load %arg4[%c0_8, %c0_9] : memref<128x128xf32, #tpu.memory_space<vmem>>, vector<128x128xf32>
    %cst_10 = arith.constant dense<0.000000e+00> : vector<8x128xf32>
    %30 = tpu.matmul %28, %29, %cst_10 {dimension_numbers = #tpu.dot_dimension_numbers<[1], [0], [0], [1], [0, 0, 1, 1], [], []>} : vector<8x128xf32>, vector<128x128xf32>, vector<8x128xf32> -> vector<8x128xf32>
    %c0_11 = arith.constant 0 : index
    %c0_12 = arith.constant 0 : index
    %31 = vector.load %arg5[%c0_11, %c0_12] : memref<1x128xf32, #tpu.memory_space<vmem>>, vector<1x128xf32>
    %32 = vector.broadcast %31 : vector<1x128xf32> to vector<8x128xf32>
    %33 = arith.addf %30, %32 : vector<8x128xf32>
    %cst_13 = arith.constant 0.000000e+00 : f32
    %34 = vector.broadcast %cst_13 : f32 to vector<8x128xf32>
    %35 = arith.maximumf %33, %34 : vector<8x128xf32>
    %c0_14 = arith.constant 0 : index
    %c0_15 = arith.constant 0 : index
    %36 = vector.load %arg6[%c0_14, %c0_15] : memref<128x128xf32, #tpu.memory_space<vmem>>, vector<128x128xf32>
    %cst_16 = arith.constant dense<0.000000e+00> : vector<8x128xf32>
    %37 = tpu.matmul %35, %36, %cst_16 {dimension_numbers = #tpu.dot_dimension_numbers<[1], [0], [0], [1], [0, 0, 1, 1], [], []>} : vector<8x128xf32>, vector<128x128xf32>, vector<8x128xf32> -> vector<8x128xf32>
    %c0_17 = arith.constant 0 : index
    %c0_18 = arith.constant 0 : index
    %38 = vector.load %arg7[%c0_17, %c0_18] : memref<1x128xf32, #tpu.memory_space<vmem>>, vector<1x128xf32>
    %39 = vector.broadcast %38 : vector<1x128xf32> to vector<8x128xf32>
    %40 = arith.addf %37, %39 : vector<8x128xf32>
    %c0_19 = arith.constant 0 : index
    %c0_20 = arith.constant 0 : index
    %41 = vector.load %arg8[%c0_19, %c0_20] : memref<8x128xf32, #tpu.memory_space<vmem>>, vector<8x128xf32>
    tpu.vector_store %arg8[%c0_19, %c0_20], %40 {strides = array<i32>} : memref<8x128xf32, #tpu.memory_space<vmem>>, vector<8x128xf32>,
    return
  }
  func.func @transform_0(%arg0: i32) -> (i32, i32) {
    %c0_i32 = arith.constant 0 : i32
    %c0_i32_0 = arith.constant 0 : i32
    return %arg0, %c0_i32 : i32, i32
  }
  func.func @transform_1(%arg0: i32) -> (i32, i32) {
    %c0_i32 = arith.constant 0 : i32
    %c0_i32_0 = arith.constant 0 : i32
    %c0_i32_1 = arith.constant 0 : i32
    return %c0_i32, %c0_i32_0 : i32, i32
  }
  func.func @transform_2(%arg0: i32) -> (i32, i32) {
    %c0_i32 = arith.constant 0 : i32
    %c0_i32_0 = arith.constant 0 : i32
    %c0_i32_1 = arith.constant 0 : i32
    return %c0_i32, %c0_i32_0 : i32, i32
  }
  func.func @transform_3(%arg0: i32) -> (i32, i32) {
    %c0_i32 = arith.constant 0 : i32
    %c0_i32_0 = arith.constant 0 : i32
    %c0_i32_1 = arith.constant 0 : i32
    return %c0_i32, %c0_i32_0 : i32, i32
  }
  func.func @transform_4(%arg0: i32) -> (i32, i32) {
    %c0_i32 = arith.constant 0 : i32
    %c0_i32_0 = arith.constant 0 : i32
    %c0_i32_1 = arith.constant 0 : i32
    return %c0_i32, %c0_i32_0 : i32, i32
  }
  func.func @transform_5(%arg0: i32) -> (i32, i32) {
    %c0_i32 = arith.constant 0 : i32
    %c0_i32_0 = arith.constant 0 : i32
    %c0_i32_1 = arith.constant 0 : i32
    return %c0_i32, %c0_i32_0 : i32, i32
  }
  func.func @transform_6(%arg0: i32) -> (i32, i32) {
    %c0_i32 = arith.constant 0 : i32
    %c0_i32_0 = arith.constant 0 : i32
    %c0_i32_1 = arith.constant 0 : i32
    return %c0_i32, %c0_i32_0 : i32, i32
  }
  func.func @transform_7(%arg0: i32) -> (i32, i32) {
    %c0_i32 = arith.constant 0 : i32
    %c0_i32_0 = arith.constant 0 : i32
    return %arg0, %c0_i32 : i32, i32
  }
}

</mosaic_0001>

<llo_original>
// kernel: tpu_custom_call.1
$region0: #{tpu_custom_call.1}
  #allocation0 [shape = 'u32[]', space=smem, size = 0x4, offset = 0x4, fixed_abs, tag = 'smem constant byte address 0x4 - core index']
  #allocation1 [shape = 'u32[72,128]{1,0:T(1,128)}', space=vmem, size = 0x9000, scoped, tag = 'internal scratch']
  %s0 = inlined_call_operand.vmem [shape: f32[8,4], index: 0, kind: input, shape index: {}]
  %s1 = inlined_call_operand.vmem [shape: f32[4,128], index: 1, kind: input, shape index: {}]
  %s2 = inlined_call_operand.vmem [shape: f32[1,128], index: 2, kind: input, shape index: {}]
  %s3 = inlined_call_operand.hbm [shape: f32[128,128], index: 3, kind: input, shape index: {}]
  %s4 = inlined_call_operand.vmem [shape: f32[1,128], index: 4, kind: input, shape index: {}]
  %s5 = inlined_call_operand.hbm [shape: f32[128,128], index: 5, kind: input, shape index: {}]
  %s6 = inlined_call_operand.vmem [shape: f32[1,128], index: 6, kind: input, shape index: {}]
  %s7 = inlined_call_operand.hbm [shape: f32[8,128], index: 7, kind: output, shape index: {}]
  %s8 = sld [smem:[#allocation0]]
  $region46: #{tpu_custom_call.1} parent=0
    _
  %s10 = ssub.s32 1, %s8
  %s11 = scalar_select 0, %s10, %s8
  $region1: #{tpu_custom_call.1} parent=0
    #allocation2 [shape = 'u8[65536]{0}', space=vmem, size = 0x10000, scoped, tag = 'input window, operand 3, single buffered']
    #allocation3 [shape = 's32[1]{0}', space=sflag, size = 0x4, scoped, tag = 'scoped memory for tpu_custom_call.1']
    #allocation4 [shape = 's32[1]{0}', space=sflag, size = 0x4, scoped, tag = 'scoped memory for tpu_custom_call.1']
    #allocation5 [shape = 'u8[65536]{0}', space=vmem, size = 0x10000, scoped, tag = 'input window, operand 5, single buffered']
    #allocation6 [shape = 's32[1]{0}', space=sflag, size = 0x4, scoped, tag = 'scoped memory for tpu_custom_call.1']
    #allocation7 [shape = 'u8[4096]{0}', space=vmem, size = 0x1000, scoped, tag = 'output window, operand 0, single buffered']
    %12 = vsyncpa [#allocation3], 0
    %13 = vsyncpa [#allocation6], 0
    %14 = vsyncpa [#allocation4], 0
    // Predicated region
    $region2: #{tpu_custom_call.1} parent=1 // pred_check
      _
    $region3: #{tpu_custom_call.1} parent=1 // pred_check_branch
      %16 = sbr.rel (0) target = $region5
    $region4: #{tpu_custom_call.1} parent=1 // pred_region
      _
    $region5: #{tpu_custom_call.1} parent=1 // pred_fallthru
      _
    // Predicated region
    $region6: #{tpu_custom_call.1} parent=1 // pred_check
      _
    $region7: #{tpu_custom_call.1} parent=1 // pred_check_branch
      %18 = sbr.rel (0) target = $region9
    $region8: #{tpu_custom_call.1} parent=1 // pred_region
      _
    $region9: #{tpu_custom_call.1} parent=1 // pred_fallthru
      _
    // Predicated region
    $region10: #{tpu_custom_call.1} parent=1 // pred_check
      _
    $region11: #{tpu_custom_call.1} parent=1 // pred_check_branch
      %20 = sbr.rel (0) target = $region13
    $region12: #{tpu_custom_call.1} parent=1 // pred_region
      _
    $region13: #{tpu_custom_call.1} parent=1 // pred_fallthru
      _
    // Predicated region
    $region14: #{tpu_custom_call.1} parent=1 // pred_check
      _
    $region15: #{tpu_custom_call.1} parent=1 // pred_check_branch
      %22 = sbr.rel (0) target = $region17
    $region16: #{tpu_custom_call.1} parent=1 // pred_region
      %24 = vsyncadd [#allocation3], 0
      %s25 = sshll.u32 %s3, 4
      %s26 = int_to_ptr.hbm [resolvable:$true] %s25
      %s27 = sshll.u32 [#allocation2], 4
      %s28 = int_to_ptr.vmem [resolvable:$true] %s27
      %33 = dma.hbm_to_vmem [thread:$0]  %s26, 2048, %s28, [#allocation3], 128, 128, 8
    $region17: #{tpu_custom_call.1} parent=1 // pred_fallthru
      _
    // Predicated region
    $region18: #{tpu_custom_call.1} parent=1 // pred_check
      _
    $region19: #{tpu_custom_call.1} parent=1 // pred_check_branch
      %35 = sbr.rel (0) target = $region21
    $region20: #{tpu_custom_call.1} parent=1 // pred_region
      _
    $region21: #{tpu_custom_call.1} parent=1 // pred_fallthru
      _
    // Predicated region
    $region22: #{tpu_custom_call.1} parent=1 // pred_check
      _
    $region23: #{tpu_custom_call.1} parent=1 // pred_check_branch
      %37 = sbr.rel (0) target = $region25
    $region24: #{tpu_custom_call.1} parent=1 // pred_region
      %39 = vsyncadd [#allocation6], 0
      %s40 = sshll.u32 %s5, 4
      %s41 = int_to_ptr.hbm [resolvable:$true] %s40
      %s42 = sshll.u32 [#allocation5], 4
      %s43 = int_to_ptr.vmem [resolvable:$true] %s42
      %48 = dma.hbm_to_vmem [thread:$0]  %s41, 2048, %s43, [#allocation6], 128, 128, 8
    $region25: #{tpu_custom_call.1} parent=1 // pred_fallthru
      _
    // Predicated region
    $region26: #{tpu_custom_call.1} parent=1 // pred_check
      _
    $region27: #{tpu_custom_call.1} parent=1 // pred_check_branch
      %50 = sbr.rel (0) target = $region29
    $region28: #{tpu_custom_call.1} parent=1 // pred_region
      _
    $region29: #{tpu_custom_call.1} parent=1 // pred_fallthru
      _
    // Predicated region
    $region30: #{tpu_custom_call.1} parent=1 // pred_check
      _
    $region31: #{tpu_custom_call.1} parent=1 // pred_check_branch
      %52 = sbr.rel (0) target = $region33
    $region32: #{tpu_custom_call.1} parent=1 // pred_region
      %54 = dma.done [#allocation3], 2048
    $region33: #{tpu_custom_call.1} parent=1 // pred_fallthru
      _
    // Predicated region
    $region34: #{tpu_custom_call.1} parent=1 // pred_check
      _
    $region35: #{tpu_custom_call.1} parent=1 // pred_check_branch
      %56 = sbr.rel (0) target = $region37
    $region36: #{tpu_custom_call.1} parent=1 // pred_region
      %58 = dma.done [#allocation6], 2048
    $region37: #{tpu_custom_call.1} parent=1 // pred_fallthru
      _
    %v59 = vld [vmem:[%s0] sm:$0xff]
    %v60 = vld [vmem:[%s2] sm:$0x1]
    %v61 = vld [vmem:[%s1] sm:$0x1]
    %63 = vset.pattern.permute.xlu0 0
    %64 = vperm.xlu0 %63, %v59
    %v65 = vpop.permute.xlu0 %64
    %v67 = vperm.slane %v61, 0
    %v68 = vmul.f32 %v65, %v67
    %v70 = vperm.slane %v60, 0
    %v72 = vadd.f32 %v70, %v68
    %v73 = vld [vmem:[%s1 + $0x1] sm:$0x1]
    %74 = vset.pattern.permute.xlu0 1
    %75 = vperm.xlu0 %74, %v59
    %v76 = vpop.permute.xlu0 %75
    %v78 = vperm.slane %v73, 0
    %v79 = vmul.f32 %v76, %v78
    %v80 = vadd.f32 %v72, %v79
    %v81 = vld [vmem:[%s1 + $0x2] sm:$0x1]
    %82 = vset.pattern.permute.xlu0 2
    %83 = vperm.xlu0 %82, %v59
    %v84 = vpop.permute.xlu0 %83
    %v86 = vperm.slane %v81, 0
    %v87 = vmul.f32 %v84, %v86
    %v88 = vadd.f32 %v80, %v87
    %v89 = vld [vmem:[%s1 + $0x3] sm:$0x1]
    %90 = vset.pattern.permute.xlu0 3
    %91 = vperm.xlu0 %90, %v59
    %v92 = vpop.permute.xlu0 %91
    %v94 = vperm.slane %v89, 0
    %v95 = vmul.f32 %v92, %v94
    %v96 = vadd.f32 %v88, %v95
    %v97 = vmax.f32 %v96, 0.0
    %v98 = vld [vmem:[#allocation2] sm:$0xff]
    %v99 = vld [vmem:[#allocation2 + $0x8] sm:$0xff]
    %v100 = vld [vmem:[#allocation2 + $0x10] sm:$0xff]
    %v101 = vld [vmem:[#allocation2 + $0x18] sm:$0xff]
    %v102 = vld [vmem:[#allocation2 + $0x20] sm:$0xff]
    %v103 = vld [vmem:[#allocation2 + $0x28] sm:$0xff]
    %v104 = vld [vmem:[#allocation2 + $0x30] sm:$0xff]
    %v105 = vld [vmem:[#allocation2 + $0x38] sm:$0xff]
    %v106 = vld [vmem:[#allocation2 + $0x40] sm:$0xff]
    %v107 = vld [vmem:[#allocation2 + $0x48] sm:$0xff]
    %v108 = vld [vmem:[#allocation2 + $0x50] sm:$0xff]
    %v109 = vld [vmem:[#allocation2 + $0x58] sm:$0xff]
    %v110 = vld [vmem:[#allocation2 + $0x60] sm:$0xff]
    %v111 = vld [vmem:[#allocation2 + $0x68] sm:$0xff]
    %v112 = vld [vmem:[#allocation2 + $0x70] sm:$0xff]
    %v113 = vld [vmem:[#allocation2 + $0x78] sm:$0xff]
    %v114 = vld [vmem:[%s4] sm:$0x1]
    %v116 = vperm.slane %v114, 0
    %118 = vmatpush.msra.mxu0 %v113
    %119 = vmatpush.msra.mxu0 %v112
    %120 = vmatpush.msra.mxu0 %v111
    %121 = vmatpush.msra.mxu0 %v110
    %122 = vmatpush.msra.mxu0 %v109
    %123 = vmatpush.msra.mxu0 %v108
    %124 = vmatpush.msra.mxu0 %v107
    %125 = vmatpush.msra.mxu0 %v106
    %126 = vmatpush.msra.mxu0 %v105
    %127 = vmatpush.msra.mxu0 %v104
    %128 = vmatpush.msra.mxu0 %v103
    %129 = vmatpush.msra.mxu0 %v102
    %130 = vmatpush.msra.mxu0 %v101
    %131 = vmatpush.msra.mxu0 %v100
    %132 = vmatpush.msra.mxu0 %v99
    %133 = vmatpush.msra.mxu0 %v98
    %134 = vmatmul.f32.gmra.mxu0 %v97
    %v135 = vpop.f32.mrf.mxu0
    %v136 = vadd.f32 %v116, %v135
    %137 = vdwg.mxu0
    %v138 = vmax.f32 %v136, 0.0
    %v139 = vld [vmem:[#allocation5] sm:$0xff]
    %v140 = vld [vmem:[#allocation5 + $0x8] sm:$0xff]
    %v141 = vld [vmem:[#allocation5 + $0x10] sm:$0xff]
    %v142 = vld [vmem:[#allocation5 + $0x18] sm:$0xff]
    %v143 = vld [vmem:[#allocation5 + $0x20] sm:$0xff]
    %v144 = vld [vmem:[#allocation5 + $0x28] sm:$0xff]
    %v145 = vld [vmem:[#allocation5 + $0x30] sm:$0xff]
    %v146 = vld [vmem:[#allocation5 + $0x38] sm:$0xff]
    %v147 = vld [vmem:[#allocation5 + $0x40] sm:$0xff]
    %v148 = vld [vmem:[#allocation5 + $0x48] sm:$0xff]
    %v149 = vld [vmem:[#allocation5 + $0x50] sm:$0xff]
    %v150 = vld [vmem:[#allocation5 + $0x58] sm:$0xff]
    %v151 = vld [vmem:[#allocation5 + $0x60] sm:$0xff]
    %v152 = vld [vmem:[#allocation5 + $0x68] sm:$0xff]
    %v153 = vld [vmem:[#allocation5 + $0x70] sm:$0xff]
    %v154 = vld [vmem:[#allocation5 + $0x78] sm:$0xff]
    %v155 = vld [vmem:[%s6] sm:$0x1]
    %v157 = vperm.slane %v155, 0
    %159 = vmatpush.msra.mxu0 %v154
    %160 = vmatpush.msra.mxu0 %v153
    %161 = vmatpush.msra.mxu0 %v152
    %162 = vmatpush.msra.mxu0 %v151
    %163 = vmatpush.msra.mxu0 %v150
    %164 = vmatpush.msra.mxu0 %v149
    %165 = vmatpush.msra.mxu0 %v148
    %166 = vmatpush.msra.mxu0 %v147
    %167 = vmatpush.msra.mxu0 %v146
    %168 = vmatpush.msra.mxu0 %v145
    %169 = vmatpush.msra.mxu0 %v144
    %170 = vmatpush.msra.mxu0 %v143
    %171 = vmatpush.msra.mxu0 %v142
    %172 = vmatpush.msra.mxu0 %v141
    %173 = vmatpush.msra.mxu0 %v140
    %174 = vmatpush.msra.mxu0 %v139
    %175 = vmatmul.f32.gmra.mxu0 %v138
    %v176 = vpop.f32.mrf.mxu0
    %v177 = vadd.f32 %v157, %v176
    %178 = vdwg.mxu0
    %179 = vst [vmem:[#allocation7] sm:$0xff] %v177
    // Predicated region
    $region38: #{tpu_custom_call.1} parent=1 // pred_check
      _
    $region39: #{tpu_custom_call.1} parent=1 // pred_check_branch
      %181 = sbr.rel (0) target = $region41
    $region40: #{tpu_custom_call.1} parent=1 // pred_region
      %183 = vsyncadd [#allocation4], 0
      %s185 = sshll.u32 [#allocation7], 4
      %s186 = int_to_ptr.vmem [resolvable:$true] %s185
      %s187 = sshll.u32 %s7, 4
      %s188 = int_to_ptr.hbm [resolvable:$true] %s187
      %190 = dma.vmem_to_hbm [thread:$0]  %s186, 128, %s188, [#allocation4]
    $region41: #{tpu_custom_call.1} parent=1 // pred_fallthru
      _
    // Predicated region
    $region42: #{tpu_custom_call.1} parent=1 // pred_check
      _
    $region43: #{tpu_custom_call.1} parent=1 // pred_check_branch
      %192 = sbr.rel (0) target = $region45
    $region44: #{tpu_custom_call.1} parent=1 // pred_region
      %194 = dma.done [#allocation4], 128
    $region45: #{tpu_custom_call.1} parent=1 // pred_fallthru
      _
    %195 = vsyncpa [#allocation3], 1
    %196 = vsyncpa [#allocation6], 1
    %197 = vsyncpa [#allocation4], 1

</llo_original>
